<compile_context>
chip_gen: v7x
topology: tpu7x:2x2x1
jax: 0.10.0
libtpu: 0.0.40
codegen_flags: <defaults>
</compile_context>

<pallas_src>
import jax
import jax.numpy as jnp
from jax.experimental import pallas as pl
from jax.experimental.pallas import tpu as pltpu

_LANE = 1024           # lane-dense last dim: large multiple of 128 -> unmasked full stores
_MAX_BLOCK_ROWS = 512  # 512x1024 f32 tile = 2 MiB in + 0.5 MiB int8 out; dbl-buffered ~5 MiB


def _threshold_kernel(thr_ref, x_ref, o_ref):
    # Single VPU compare + narrow cast; int8 output = 4x less write bandwidth.
    o_ref[...] = (x_ref[...] >= thr_ref[0]).astype(o_ref.dtype)


class ThresholdDecoder:
    """Pallas equivalent of the PyTorch ThresholdDecoder module."""

    def __init__(self, threshold: float = 0.5):
        self.threshold = float(threshold)

    def _threshold_pallas(self, x_flat: jax.Array) -> jax.Array:
        """Elementwise threshold on a flat array; returns int8 {0,1} tokens of the same length."""
        n = int(x_flat.shape[0])
        rows = max(1, -(-n // _LANE))
        if rows <= _MAX_BLOCK_ROWS:
            # Full-dim sublane block: no (8/32, 128) divisibility constraint, single grid step.
            block_rows = rows
        else:
            block_rows = _MAX_BLOCK_ROWS
            rows = -(-rows // block_rows) * block_rows

        padded_n = rows * _LANE
        if padded_n != n:
            # Padded tail produces garbage tokens; it is sliced off below.
            x_flat = jnp.pad(x_flat, (0, padded_n - n))
        x2d = x_flat.reshape(rows, _LANE)

        # Threshold as an SMEM scalar (no recompile when the threshold changes).
        thr = jnp.full((1,), self.threshold, dtype=x2d.dtype)

        grid = (rows // block_rows,)
        cost = pl.CostEstimate(
            flops=padded_n,
            transcendentals=0,
            bytes_accessed=padded_n * x2d.dtype.itemsize + padded_n,  # f32 read + int8 write
        )

        tok2d = pl.pallas_call(
            _threshold_kernel,
            out_shape=jax.ShapeDtypeStruct((rows, _LANE), jnp.int8),
            grid_spec=pltpu.PrefetchScalarGridSpec(
                num_scalar_prefetch=0,
                grid=grid,
                in_specs=[
                    pl.BlockSpec(memory_space=pltpu.MemorySpace.SMEM),    # threshold scalar
                    pl.BlockSpec((block_rows, _LANE), lambda i: (i, 0)),  # logits tile
                ],
                out_specs=pl.BlockSpec((block_rows, _LANE), lambda i: (i, 0)),
            ),
            compiler_params=pltpu.CompilerParams(dimension_semantics=("parallel",)),
            cost_estimate=cost,
        )(thr, x2d)

        return tok2d.reshape(-1)[:n]

    def __call__(self, outputs: jax.Array, from_logits: bool = True):
        outputs = jnp.asarray(outputs)
        if not from_logits:
            # No compute: just materialize as nested Python lists (tolist()).
            return jax.device_get(outputs).tolist()

        # torch: where(outputs >= thr, 1, 0).squeeze(dim=-1)
        x = outputs
        if x.ndim >= 1 and x.shape[-1] == 1:
            x = jnp.squeeze(x, axis=-1)
        out_shape = x.shape

        tok_flat = self._threshold_pallas(x.reshape(-1))
        tokens = tok_flat.reshape(out_shape)
        # torch .tolist() -> nested Python lists (host sync is inherent to the spec).
        return jax.device_get(tokens).tolist()


if __name__ == "__main__":
    key = jax.random.PRNGKey(0)
    B, S = 2, 128  # small (B, S, 1) logit tensor as the module implies
    outputs = jax.random.uniform(key, (B, S, 1), dtype=jnp.float32)

    decoder = ThresholdDecoder(threshold=0.5)

    # Run the kernel once and block on the device result.
    tok_dev = decoder._threshold_pallas(jnp.squeeze(outputs, axis=-1).reshape(-1))
    jax.block_until_ready(tok_dev)

    # Full forward (kernel + host glue) against a pure-JAX reference.
    tokens = decoder(outputs, from_logits=True)
    ref = jnp.where(outputs >= 0.5, 1, 0).squeeze(-1).astype(jnp.int32)
    assert jnp.array_equal(jnp.asarray(tokens, dtype=jnp.int32), ref)

    # Padding path: non-multiple-of-1024 element count.
    key2 = jax.random.PRNGKey(1)
    out_pad = jax.random.uniform(key2, (5, 1111, 1), dtype=jnp.float32) - 0.25
    tok_pad = decoder._threshold_pallas(jnp.squeeze(out_pad, -1).reshape(-1))
    jax.block_until_ready(tok_pad)
    ref_pad = (jnp.squeeze(out_pad, -1).reshape(-1) >= 0.5).astype(jnp.int8)
    assert jnp.array_equal(tok_pad, ref_pad)

    # Multi-block tiled path (rows > _MAX_BLOCK_ROWS) plus a ragged tail.
    key3 = jax.random.PRNGKey(2)
    n_big = 520 * _LANE + 7
    big = jax.random.uniform(key3, (n_big,), dtype=jnp.float32)
    tok_big = decoder._threshold_pallas(big)
    jax.block_until_ready(tok_big)
    assert jnp.array_equal(tok_big, (big >= 0.5).astype(jnp.int8))

    # from_logits=False path (pure tolist passthrough, no kernel).
    _ = decoder(outputs, from_logits=False)

    print("KERNEL_OK")
</pallas_src>

<mosaic_0001>
module attributes {stable_mosaic.version = 11 : i64} {
  func.func @_threshold_kernel(%arg0: i32, %arg1: memref<1xf32, #tpu.memory_space<smem>>, %arg2: memref<1x1024xf32, #tpu.memory_space<vmem>>, %arg3: memref<1x1024xi8, #tpu.memory_space<vmem>>) attributes {dimension_semantics = [#tpu.dimension_semantics<parallel>], iteration_bounds = array<i64: 1>, scalar_prefetch = 0 : i64, scratch_operands = 0 : i64, tpu.core_type = #tpu.core_type<tc>, window_params = [{transform_indices = @transform_0, window_bounds = array<i64: 1>}, {transform_indices = @transform_1, window_bounds = array<i64: 1, 1024>}, {transform_indices = @transform_2, window_bounds = array<i64: 1, 1024>}]} {
    %c0 = arith.constant 0 : index
    %c0_0 = arith.constant 0 : index
    %0 = vector.load %arg2[%c0, %c0_0] : memref<1x1024xf32, #tpu.memory_space<vmem>>, vector<1x1024xf32>
    %c0_1 = arith.constant 0 : index
    %1 = memref.load %arg1[%c0_1] : memref<1xf32, #tpu.memory_space<smem>>
    %2 = vector.broadcast %1 : f32 to vector<1x1024xf32>
    %3 = arith.cmpf oge, %0, %2 : vector<1x1024xf32>
    %4 = arith.extui %3 : vector<1x1024xi1> to vector<1x1024xi8>
    %c0_2 = arith.constant 0 : index
    %c0_3 = arith.constant 0 : index
    %5 = vector.load %arg3[%c0_2, %c0_3] : memref<1x1024xi8, #tpu.memory_space<vmem>>, vector<1x1024xi8>
    tpu.vector_store %arg3[%c0_2, %c0_3], %4 {strides = array<i32>} : memref<1x1024xi8, #tpu.memory_space<vmem>>, vector<1x1024xi8>,
    return
  }
  func.func @transform_0(%arg0: i32) -> i32 {
    %c0_i32 = arith.constant 0 : i32
    %c0_i32_0 = arith.constant 0 : i32
    return %c0_i32 : i32
  }
  func.func @transform_1(%arg0: i32) -> (i32, i32) {
    %c0_i32 = arith.constant 0 : i32
    %c0_i32_0 = arith.constant 0 : i32
    return %arg0, %c0_i32 : i32, i32
  }
  func.func @transform_2(%arg0: i32) -> (i32, i32) {
    %c0_i32 = arith.constant 0 : i32
    %c0_i32_0 = arith.constant 0 : i32
    return %arg0, %c0_i32 : i32, i32
  }
}

</mosaic_0001>

<llo_original>
// kernel: tpu_custom_call.1
$region0: #{tpu_custom_call.1}
  #allocation0 [shape = 'u32[]', space=smem, size = 0x4, offset = 0x4, fixed_abs, tag = 'smem constant byte address 0x4 - core index']
  #allocation1 [shape = 'u32[144,128]{1,0:T(1,128)}', space=vmem, size = 0x12000, scoped, tag = 'internal scratch']
  #allocation2 [shape = 'f32[1]{0:T(128)S(6)}', space=smem, size = 0x200, scoped, tag = 'scoped memory for tpu_custom_call.1']
  %s0 = inlined_call_operand.<no memory space> [shape: f32[1], index: 0, kind: input, shape index: {}]
  %s1 = inlined_call_operand.hbm [shape: f32[1,1024], index: 1, kind: input, shape index: {}]
  %s2 = inlined_call_operand.hbm [shape: s8[1,1024], index: 2, kind: output, shape index: {}]
  %s3 = sld [smem:[#allocation0]]
  $region22: #{tpu_custom_call.1} parent=0
    _
  %s5 = ssub.s32 1, %s3
  %s6 = scalar_select 0, %s5, %s3
  %7 = sst [smem:[#allocation2]] %s0
  $region1: #{tpu_custom_call.1} parent=0
    #allocation3 [shape = 'u8[4096]{0}', space=vmem, size = 0x1000, scoped, tag = 'input window, operand 1, single buffered']
    #allocation4 [shape = 's32[1]{0}', space=sflag, size = 0x4, scoped, tag = 'scoped memory for tpu_custom_call.1']
    #allocation5 [shape = 's32[1]{0}', space=sflag, size = 0x4, scoped, tag = 'scoped memory for tpu_custom_call.1']
    #allocation6 [shape = 'u8[4096]{0}', space=vmem, size = 0x1000, scoped, tag = 'output window, operand 0, single buffered']
    %8 = vsyncpa [#allocation4], 0
    %9 = vsyncpa [#allocation5], 0
    // Predicated region
    $region2: #{tpu_custom_call.1} parent=1 // pred_check
      _
    $region3: #{tpu_custom_call.1} parent=1 // pred_check_branch
      %11 = sbr.rel (0) target = $region5
    $region4: #{tpu_custom_call.1} parent=1 // pred_region
      _
    $region5: #{tpu_custom_call.1} parent=1 // pred_fallthru
      _
    // Predicated region
    $region6: #{tpu_custom_call.1} parent=1 // pred_check
      _
    $region7: #{tpu_custom_call.1} parent=1 // pred_check_branch
      %13 = sbr.rel (0) target = $region9
    $region8: #{tpu_custom_call.1} parent=1 // pred_region
      %s15 = ssub.s32 128, 128
      %16 = vsyncadd [#allocation4], %s15
      %s18 = sshll.u32 [#allocation3], 4
      %s19 = int_to_ptr.vmem [resolvable:$true] %s18
      %21 = dma.hbm_to_vmem [thread:$0]  %s1, 128, %s19, [#allocation4]
    $region9: #{tpu_custom_call.1} parent=1 // pred_fallthru
      _
    // Predicated region
    $region10: #{tpu_custom_call.1} parent=1 // pred_check
      _
    $region11: #{tpu_custom_call.1} parent=1 // pred_check_branch
      %23 = sbr.rel (0) target = $region13
    $region12: #{tpu_custom_call.1} parent=1 // pred_region
      %24 = dma.done [#allocation4], 128
    $region13: #{tpu_custom_call.1} parent=1 // pred_fallthru
      _
    %v27 = vld [vmem:[#allocation3] sm:$0xff]
    %s28 = sld [smem:[#allocation2]]
    %v29 = vstv %s28
    %vm30 = vcmp.ge.f32.partialorder %v27, %v29
    %v31 = vsel %vm30, 1, 0
    %v33 = vunpack.c.l.s4 286326784
    %v34 = vunpack.c.0.s8 %v33
    %v35 = vlaneseq
    %v36 = vshrl.u32 %v35, 7
    %v37 = vsub.s32 %v34, %v36
    %v38 = vrot.slane %v31, %v37
    %v40 = vunpack.c.l.s4 858989090
    %v41 = vunpack.c.0.s8 %v40
    %v42 = vlaneseq
    %v43 = vshrl.u32 %v42, 7
    %v44 = vsub.s32 %v41, %v43
    %v45 = vrot.slane %v31, %v44
    %v47 = vunpack.c.l.s4 1431651396
    %v48 = vunpack.c.0.s8 %v47
    %v49 = vlaneseq
    %v50 = vshrl.u32 %v49, 7
    %v51 = vsub.s32 %v48, %v50
    %v52 = vrot.slane %v31, %v51
    %v54 = vunpack.c.l.s4 2004313702
    %v55 = vunpack.c.0.s8 %v54
    %v56 = vlaneseq
    %v57 = vshrl.u32 %v56, 7
    %v58 = vsub.s32 %v55, %v57
    %v59 = vrot.slane %v31, %v58
    %vm60 = vcmp.ne.s32.totalorder %v38, 0
    %vm61 = vcmp.ne.s32.totalorder %v45, 0
    %vm62 = vcmp.ne.s32.totalorder %v52, 0
    %vm63 = vcmp.ne.s32.totalorder %v59, 0
    %v64 = vsel %vm60, 1, 0
    %v65 = vsel %vm61, 1, 0
    %v66 = vsel %vm62, 1, 0
    %v67 = vsel %vm63, 1, 0
    %v68 = vpack.c.b16 %v65, %v64
    %v69 = vpack.c.b16 %v67, %v66
    %v70 = vpack.c.b8 %v69, %v68
    %vm71 = vnez %v70
    %v72 = vsel %vm71, 16843009, 0
    %v73 = vcombine.high %v72, %v72
    %v75 = vunpack.c.l.s4 1966171168
    %v76 = vunpack.c.0.s8 %v75
    %v77 = vlaneseq
    %v78 = vshrl.u32 %v77, 7
    %v79 = vsub.s32 %v76, %v78
    %v80 = vrot.slane %v72, %v79
    %v82 = vunpack.c.l.s4 1966171168
    %v83 = vunpack.c.0.s8 %v82
    %v84 = vlaneseq
    %v85 = vshrl.u32 %v84, 7
    %v86 = vsub.s32 %v83, %v85
    %v87 = vrot.slane %v73, %v86
    %v88 = vcombine.high %v80, %v80
    %v89 = vcombine.high %v87, %v87
    %v91 = vunpack.c.l.s4 1966171168
    %v92 = vunpack.c.0.s8 %v91
    %v93 = vlaneseq
    %v94 = vshrl.u32 %v93, 7
    %v95 = vsub.s32 %v92, %v94
    %v96 = vrot.slane %v80, %v95
    %v98 = vunpack.c.l.s4 1966171168
    %v99 = vunpack.c.0.s8 %v98
    %v100 = vlaneseq
    %v101 = vshrl.u32 %v100, 7
    %v102 = vsub.s32 %v99, %v101
    %v103 = vrot.slane %v87, %v102
    %v105 = vunpack.c.l.s4 1966171168
    %v106 = vunpack.c.0.s8 %v105
    %v107 = vlaneseq
    %v108 = vshrl.u32 %v107, 7
    %v109 = vsub.s32 %v106, %v108
    %v110 = vrot.slane %v88, %v109
    %v112 = vunpack.c.l.s4 1966171168
    %v113 = vunpack.c.0.s8 %v112
    %v114 = vlaneseq
    %v115 = vshrl.u32 %v114, 7
    %v116 = vsub.s32 %v113, %v115
    %v117 = vrot.slane %v89, %v116
    %v118 = vcombine.high %v96, %v96
    %v119 = vcombine.high %v103, %v103
    %v120 = vcombine.high %v110, %v110
    %v121 = vcombine.high %v117, %v117
    %vm122 = vnez %v96
    %vm123 = vnez %v110
    %vm124 = vnez %v118
    %vm125 = vnez %v120
    %vm126 = vnez %v103
    %vm127 = vnez %v117
    %vm128 = vnez %v119
    %vm129 = vnez %v121
    %v130 = vsel %vm122, 16843009, 0
    %v131 = vsel %vm123, 16843009, 0
    %v132 = vsel %vm124, 16843009, 0
    %v133 = vsel %vm125, 16843009, 0
    %v134 = vsel %vm126, 16843009, 0
    %v135 = vsel %vm127, 16843009, 0
    %v136 = vsel %vm128, 16843009, 0
    %v137 = vsel %vm129, 16843009, 0
    %v138 = vcombine.low %v130, %v131
    %v139 = vcombine.low %v132, %v133
    %v140 = vcombine.low %v134, %v135
    %v141 = vcombine.low %v136, %v137
    %v143 = vunpack.c.l.s4 1966171168
    %v144 = vunpack.c.0.s8 %v143
    %v145 = vlaneseq
    %v146 = vshrl.u32 %v145, 7
    %v147 = vsub.s32 %v144, %v146
    %v148 = vrot.slane %v138, %v147
    %v150 = vunpack.c.l.s4 1966171168
    %v151 = vunpack.c.0.s8 %v150
    %v152 = vlaneseq
    %v153 = vshrl.u32 %v152, 7
    %v154 = vsub.s32 %v151, %v153
    %v155 = vrot.slane %v139, %v154
    %v157 = vunpack.c.l.s4 1966171168
    %v158 = vunpack.c.0.s8 %v157
    %v159 = vlaneseq
    %v160 = vshrl.u32 %v159, 7
    %v161 = vsub.s32 %v158, %v160
    %v162 = vrot.slane %v140, %v161
    %v164 = vunpack.c.l.s4 1966171168
    %v165 = vunpack.c.0.s8 %v164
    %v166 = vlaneseq
    %v167 = vshrl.u32 %v166, 7
    %v168 = vsub.s32 %v165, %v167
    %v169 = vrot.slane %v141, %v168
    %v170 = vcombine.low %v148, %v155
    %v171 = vcombine.low %v162, %v169
    %v173 = vunpack.c.l.s4 1966171168
    %v174 = vunpack.c.0.s8 %v173
    %v175 = vlaneseq
    %v176 = vshrl.u32 %v175, 7
    %v177 = vsub.s32 %v174, %v176
    %v178 = vrot.slane %v170, %v177
    %v180 = vunpack.c.l.s4 1966171168
    %v181 = vunpack.c.0.s8 %v180
    %v182 = vlaneseq
    %v183 = vshrl.u32 %v182, 7
    %v184 = vsub.s32 %v181, %v183
    %v185 = vrot.slane %v171, %v184
    %v186 = vcombine.low %v178, %v185
    %vm187 = vcmask 1040384
    %vm188 = vsmask.f32 0
    %vm189 = vmand %vm187, %vm188
    %vm190 = vcmask 1041409
    %vm191 = vsmask.f32 1024
    %vm192 = vmand %vm190, %vm191
    %vm193 = vmor %vm192, %vm189
    %vm194 = vcmask 1042434
    %vm195 = vsmask.f32 2048
    %vm196 = vmand %vm194, %vm195
    %vm197 = vmor %vm196, %vm193
    %vm198 = vcmask 1043459
    %vm199 = vsmask.f32 3072
    %vm200 = vmand %vm198, %vm199
    %vm201 = vmor %vm200, %vm197
    %vm202 = vcmask 1044484
    %vm203 = vsmask.f32 4096
    %vm204 = vmand %vm202, %vm203
    %vm205 = vmor %vm204, %vm201
    %vm206 = vcmask 1045509
    %vm207 = vsmask.f32 5120
    %vm208 = vmand %vm206, %vm207
    %vm209 = vmor %vm208, %vm205
    %vm210 = vcmask 1046534
    %vm211 = vsmask.f32 6144
    %vm212 = vmand %vm210, %vm211
    %vm213 = vmor %vm212, %vm209
    %vm214 = vcmask 1047559
    %vm215 = vsmask.f32 7168
    %vm216 = vmand %vm214, %vm215
    %vm217 = vmor %vm216, %vm213
    %v218 = vld [vmem:[#allocation6] sm:$0xff]
    %v219 = vsel %vm217, %v186, %v218
    %220 = vst [vmem:[#allocation6] sm:$0xff] %v219
    // Predicated region
    $region14: #{tpu_custom_call.1} parent=1 // pred_check
      _
    $region15: #{tpu_custom_call.1} parent=1 // pred_check_branch
      %222 = sbr.rel (0) target = $region17
    $region16: #{tpu_custom_call.1} parent=1 // pred_region
      %s224 = ssub.s32 128, 128
      %225 = vsyncadd [#allocation5], %s224
      %s227 = sshll.u32 [#allocation6], 4
      %s228 = int_to_ptr.vmem [resolvable:$true] %s227
      %230 = dma.vmem_to_hbm [thread:$0]  %s228, 128, %s2, [#allocation5]
    $region17: #{tpu_custom_call.1} parent=1 // pred_fallthru
      _
    // Predicated region
    $region18: #{tpu_custom_call.1} parent=1 // pred_check
      _
    $region19: #{tpu_custom_call.1} parent=1 // pred_check_branch
      %232 = sbr.rel (0) target = $region21
    $region20: #{tpu_custom_call.1} parent=1 // pred_region
      %233 = dma.done [#allocation5], 128
    $region21: #{tpu_custom_call.1} parent=1 // pred_fallthru
      _
    %234 = vsyncpa [#allocation4], 1
    %235 = vsyncpa [#allocation5], 1

</llo_original>
